<compile_context>
chip_gen: v6e
topology: v6e:2x2x1
jax: 0.10.0
libtpu: 0.0.40
codegen_flags: <defaults>
</compile_context>

<pallas_src>
import functools

import numpy as np
import jax
import jax.numpy as jnp
from jax import lax
from jax.experimental import pallas as pl
from jax.experimental.pallas import tpu as pltpu


def _cdiv(a: int, b: int) -> int:
    return -(-a // b)


def _round_up(a: int, b: int) -> int:
    return _cdiv(a, b) * b


# -----------------------------------------------------------------------------
# Interpolation weight matrices (host-side numpy constants).
# Matches PyTorch upsample_bilinear2d with align_corners=False, antialias=False.
# -----------------------------------------------------------------------------
def _bilinear_matrix_np(out_size: int, in_size: int) -> np.ndarray:
    scale = in_size / out_size
    src = (np.arange(out_size, dtype=np.float64) + 0.5) * scale - 0.5
    src = np.clip(src, 0.0, in_size - 1)
    i0 = np.floor(src).astype(np.int64)
    i1 = np.minimum(i0 + 1, in_size - 1)
    w1 = (src - i0).astype(np.float32)
    w0 = (1.0 - w1).astype(np.float32)
    m = np.zeros((out_size, in_size), dtype=np.float32)
    rows = np.arange(out_size)
    m[rows, i0] += w0
    m[rows, i1] += w1          # i0 == i1 at clipped edges -> total weight 1.0
    return m                   # (out_size, in_size)


# -----------------------------------------------------------------------------
# Pallas kernel: resize a batch of B channel planes per grid step.
# -----------------------------------------------------------------------------
def _resize_kernel(wh_ref, wwT_ref, img_ref, out_ref, *, compute_dtype, n_unroll):
    # wh_ref : (out_H, H_in)     height-interp weights   (compute_dtype, constant)
    # wwT_ref: (W_in,  out_Wp)   width-interp weights^T, lane-padded (constant)
    # img_ref: (B, H_in, W_in)   B channel planes of this grid step
    # out_ref: (B, out_H, out_Wp)
    B = img_ref.shape[0]
    wh = wh_ref[...]          # hoisted: loop-invariant operands
    wwT = wwT_ref[...]
    out_is_int = jnp.issubdtype(out_ref.dtype, jnp.integer)

    def body(b, carry):
        plane = img_ref[b].astype(compute_dtype)                       # (H_in, W_in)
        # Width pass (MXU):  (H_in, W_in) @ (W_in, out_Wp)
        t = jnp.dot(plane, wwT, preferred_element_type=jnp.float32)    # (H_in, out_Wp)
        # Height pass (MXU): (out_H, H_in) @ (H_in, out_Wp)
        o = jnp.dot(wh, t.astype(compute_dtype),
                    preferred_element_type=jnp.float32)                # (out_H, out_Wp)
        if out_is_int:
            info = jnp.iinfo(out_ref.dtype)
            o = jnp.clip(jnp.round(o), info.min, info.max)
        out_ref[b] = o.astype(out_ref.dtype)                           # lane-dense store
        return carry

    lax.fori_loop(0, B, body, 0, unroll=n_unroll)


# -----------------------------------------------------------------------------
# Wrappers
# -----------------------------------------------------------------------------
def _vmem_capacity_bytes() -> int:
    # Sizing-only query; a failure here must never break the kernel, so fall
    # back to the most conservative (v7x-class) capacity.
    try:
        return int(pltpu.get_tpu_info().vmem_capacity_bytes)
    except Exception:  # noqa: BLE001  (sizing fallback only)
        return 64 * 1024 * 1024


@functools.partial(jax.jit, static_argnames=("size", "use_bf16"))
def _resize_keypt_impl(image, anno, size, use_bf16=True):
    """image: (N, C, H_in, W_in);  anno: (K, 3)."""
    N, C, H_in, W_in = image.shape
    out_H, out_W = size
    NC = N * C
    out_Wp = _round_up(out_W, 128)           # lane-dense output stores

    compute_dtype = jnp.bfloat16 if use_bf16 else jnp.float32

    # Constant interpolation matrices, built on the host (static shapes).
    wh_np = _bilinear_matrix_np(out_H, H_in)                    # (out_H, H_in)
    wwT_np = np.zeros((W_in, out_Wp), dtype=np.float32)
    wwT_np[:, :out_W] = _bilinear_matrix_np(out_W, W_in).T      # (W_in, out_Wp)
    wh = jnp.asarray(wh_np, dtype=compute_dtype)
    wwT = jnp.asarray(wwT_np, dtype=compute_dtype)

    # ---- generation-aware VMEM sizing --------------------------------------
    vmem_cap = _vmem_capacity_bytes()
    if vmem_cap <= 80 * 1024 * 1024:         # v7x-class: 64 MiB / TensorCore, 2 TCs
        vmem_limit = 40 * 1024 * 1024
        budget = 24 * 1024 * 1024
        two_cores = True
    else:                                    # v5e / v6e: 128 MiB, 1 TC
        vmem_limit = 80 * 1024 * 1024
        budget = 56 * 1024 * 1024
        two_cores = False

    itemsize = jnp.dtype(image.dtype).itemsize
    cbytes = jnp.dtype(compute_dtype).itemsize
    # Only the double-buffered input/output blocks scale with B; the matmul
    # intermediates are live for a single fori_loop iteration only.
    per_plane = 2 * H_in * W_in * itemsize + 2 * out_H * out_Wp * itemsize
    fixed = (2 * (out_H * H_in + W_in * out_Wp) * cbytes        # weights (dbl-buf)
             + H_in * W_in * cbytes                             # plane cast
             + H_in * out_Wp * (4 + cbytes)                     # width-pass result
             + out_H * out_Wp * 4)                              # height-pass result
    B = int(max(1, min(NC, (budget - fixed) // per_plane)))
    grid_len = _cdiv(NC, B)

    # v7x only: small odd grids leave one TensorCore idle for a whole round;
    # shrink B to the largest value that yields an even grid (if any exists).
    if two_cores and grid_len > 1 and grid_len % 2 == 1:
        for cand in range(B - 1, 0, -1):
            if _cdiv(NC, cand) % 2 == 0:
                B = cand
                grid_len = _cdiv(NC, B)
                break

    img_flat = image.reshape(NC, H_in, W_in)    # metadata-only reshape

    kernel = functools.partial(_resize_kernel,
                               compute_dtype=compute_dtype,
                               n_unroll=min(B, 8))

    out_padded = pl.pallas_call(
        kernel,
        out_shape=jax.ShapeDtypeStruct((NC, out_H, out_Wp), image.dtype),
        grid_spec=pltpu.PrefetchScalarGridSpec(
            num_scalar_prefetch=0,
            grid=(grid_len,),
            in_specs=[
                pl.BlockSpec((out_H, H_in), lambda i: (0, 0)),       # Wh (constant)
                pl.BlockSpec((W_in, out_Wp), lambda i: (0, 0)),      # Ww^T (constant)
                pl.BlockSpec((B, H_in, W_in), lambda i: (i, 0, 0)),  # image planes
            ],
            out_specs=pl.BlockSpec((B, out_H, out_Wp), lambda i: (i, 0, 0)),
        ),
        compiler_params=pltpu.CompilerParams(
            dimension_semantics=("parallel",),
            vmem_limit_bytes=vmem_limit,
        ),
    )(wh, wwT, img_flat)

    new_image = out_padded[:, :, :out_W].reshape(N, C, out_H, out_W)

    # Keypoint normalization: trivial (K, 3) elementwise op -> plain JAX.
    # (col 2 divided by 1.0 is a bit-exact identity.)
    new_anno = anno / jnp.array([W_in, H_in, 1.0], dtype=anno.dtype)

    return {"image": new_image, "anno": new_anno}


def resize_keypt(image, anno, size, use_bf16=True):
    """Functional equivalent of Resize_Keypt.forward."""
    return _resize_keypt_impl(image, anno, size=tuple(size), use_bf16=use_bf16)


# -----------------------------------------------------------------------------
# Demo / self-check
# -----------------------------------------------------------------------------
if __name__ == "__main__":
    key = jax.random.PRNGKey(0)
    k_img, k_anno = jax.random.split(key)

    N, C, H, W = 2, 4, 16, 16
    SIZE = (8, 8)   # Resize_Keypt(size=(8, 8))

    image = jax.random.normal(k_img, (N, C, H, W), dtype=jnp.float32)
    anno = jax.random.uniform(k_anno, (14, 3), dtype=jnp.float32,
                              minval=0.0, maxval=float(H))

    out = resize_keypt(image, anno, SIZE)
    jax.block_until_ready(out)

    # Reference: same separable bilinear weights, full-f32 einsum.
    wh_ref = jnp.asarray(_bilinear_matrix_np(SIZE[0], H))
    ww_ref = jnp.asarray(_bilinear_matrix_np(SIZE[1], W))
    ref_img = jnp.einsum("oh,nchw,pw->ncop", wh_ref, image, ww_ref)
    ref_anno = anno / jnp.array([W, H, 1.0], dtype=anno.dtype)

    assert out["image"].shape == (N, C, SIZE[0], SIZE[1])
    assert out["anno"].shape == (14, 3)
    err = float(jnp.max(jnp.abs(out["image"] - ref_img)))
    assert err < 5e-2, f"image mismatch (max abs err {err})"   # bf16 compute path
    assert jnp.allclose(out["anno"], ref_anno, atol=1e-6), "anno mismatch"

    print("KERNEL_OK")
</pallas_src>

<mosaic_0001>
module attributes {stable_mosaic.version = 11 : i64} {
  func.func @_resize_kernel(%arg0: i32, %arg1: memref<8x16xbf16, #tpu.memory_space<vmem>>, %arg2: memref<16x128xbf16, #tpu.memory_space<vmem>>, %arg3: memref<8x16x16xf32, #tpu.memory_space<vmem>>, %arg4: memref<8x8x128xf32, #tpu.memory_space<vmem>>) attributes {dimension_semantics = [#tpu.dimension_semantics<parallel>], iteration_bounds = array<i64: 1>, scalar_prefetch = 0 : i64, scratch_operands = 0 : i64, tpu.core_type = #tpu.core_type<tc>, window_params = [{pipeline_mode = #tpu.pipeline_mode<synchronous>, transform_indices = @transform_0, window_bounds = array<i64: 8, 16>}, {pipeline_mode = #tpu.pipeline_mode<synchronous>, transform_indices = @transform_1, window_bounds = array<i64: 16, 128>}, {transform_indices = @transform_2, window_bounds = array<i64: 8, 16, 16>}, {transform_indices = @transform_3, window_bounds = array<i64: 8, 8, 128>}]} {
    %c0 = arith.constant 0 : index
    %c0_0 = arith.constant 0 : index
    %0 = vector.load %arg1[%c0, %c0_0] : memref<8x16xbf16, #tpu.memory_space<vmem>>, vector<8x16xbf16>
    %c0_1 = arith.constant 0 : index
    %c0_2 = arith.constant 0 : index
    %1 = vector.load %arg2[%c0_1, %c0_2] : memref<16x128xbf16, #tpu.memory_space<vmem>>, vector<16x128xbf16>
    %c0_i32 = arith.constant 0 : i32
    %2 = arith.index_cast %c0_i32 : i32 to index
    %c0_3 = arith.constant 0 : index
    %c0_4 = arith.constant 0 : index
    %3 = vector.load %arg3[%2, %c0_3, %c0_4] : memref<8x16x16xf32, #tpu.memory_space<vmem>>, vector<1x16x16xf32>
    %4 = vector.shape_cast %3 : vector<1x16x16xf32> to vector<16x16xf32>
    %5 = arith.truncf %4 : vector<16x16xf32> to vector<16x16xbf16>
    %cst = arith.constant dense<0.000000e+00> : vector<16x128xf32>
    %6 = tpu.matmul %5, %1, %cst {dimension_numbers = #tpu.dot_dimension_numbers<[1], [0], [0], [1], [0, 0, 1, 1], [], []>} : vector<16x16xbf16>, vector<16x128xbf16>, vector<16x128xf32> -> vector<16x128xf32>
    %7 = arith.truncf %6 : vector<16x128xf32> to vector<16x128xbf16>
    %cst_5 = arith.constant dense<0.000000e+00> : vector<8x128xf32>
    %8 = tpu.matmul %0, %7, %cst_5 {dimension_numbers = #tpu.dot_dimension_numbers<[1], [0], [0], [1], [0, 0, 1, 1], [], []>} : vector<8x16xbf16>, vector<16x128xbf16>, vector<8x128xf32> -> vector<8x128xf32>
    %9 = arith.index_cast %c0_i32 : i32 to index
    %c0_6 = arith.constant 0 : index
    %c0_7 = arith.constant 0 : index
    %10 = vector.load %arg4[%9, %c0_6, %c0_7] : memref<8x8x128xf32, #tpu.memory_space<vmem>>, vector<1x8x128xf32>
    %11 = vector.shape_cast %10 : vector<1x8x128xf32> to vector<8x128xf32>
    %12 = vector.shape_cast %8 : vector<8x128xf32> to vector<1x8x128xf32>
    tpu.vector_store %arg4[%9, %c0_6, %c0_7], %12 {strides = array<i32>} : memref<8x8x128xf32, #tpu.memory_space<vmem>>, vector<1x8x128xf32>,
    %c1_i32 = arith.constant 1 : i32
    %13 = arith.index_cast %c1_i32 : i32 to index
    %c0_8 = arith.constant 0 : index
    %c0_9 = arith.constant 0 : index
    %14 = vector.load %arg3[%13, %c0_8, %c0_9] : memref<8x16x16xf32, #tpu.memory_space<vmem>>, vector<1x16x16xf32>
    %15 = vector.shape_cast %14 : vector<1x16x16xf32> to vector<16x16xf32>
    %16 = arith.truncf %15 : vector<16x16xf32> to vector<16x16xbf16>
    %cst_10 = arith.constant dense<0.000000e+00> : vector<16x128xf32>
    %17 = tpu.matmul %16, %1, %cst_10 {dimension_numbers = #tpu.dot_dimension_numbers<[1], [0], [0], [1], [0, 0, 1, 1], [], []>} : vector<16x16xbf16>, vector<16x128xbf16>, vector<16x128xf32> -> vector<16x128xf32>
    %18 = arith.truncf %17 : vector<16x128xf32> to vector<16x128xbf16>
    %cst_11 = arith.constant dense<0.000000e+00> : vector<8x128xf32>
    %19 = tpu.matmul %0, %18, %cst_11 {dimension_numbers = #tpu.dot_dimension_numbers<[1], [0], [0], [1], [0, 0, 1, 1], [], []>} : vector<8x16xbf16>, vector<16x128xbf16>, vector<8x128xf32> -> vector<8x128xf32>
    %20 = arith.index_cast %c1_i32 : i32 to index
    %c0_12 = arith.constant 0 : index
    %c0_13 = arith.constant 0 : index
    %21 = vector.load %arg4[%20, %c0_12, %c0_13] : memref<8x8x128xf32, #tpu.memory_space<vmem>>, vector<1x8x128xf32>
    %22 = vector.shape_cast %21 : vector<1x8x128xf32> to vector<8x128xf32>
    %23 = vector.shape_cast %19 : vector<8x128xf32> to vector<1x8x128xf32>
    tpu.vector_store %arg4[%20, %c0_12, %c0_13], %23 {strides = array<i32>} : memref<8x8x128xf32, #tpu.memory_space<vmem>>, vector<1x8x128xf32>,
    %c2_i32 = arith.constant 2 : i32
    %24 = arith.index_cast %c2_i32 : i32 to index
    %c0_14 = arith.constant 0 : index
    %c0_15 = arith.constant 0 : index
    %25 = vector.load %arg3[%24, %c0_14, %c0_15] : memref<8x16x16xf32, #tpu.memory_space<vmem>>, vector<1x16x16xf32>
    %26 = vector.shape_cast %25 : vector<1x16x16xf32> to vector<16x16xf32>
    %27 = arith.truncf %26 : vector<16x16xf32> to vector<16x16xbf16>
    %cst_16 = arith.constant dense<0.000000e+00> : vector<16x128xf32>
    %28 = tpu.matmul %27, %1, %cst_16 {dimension_numbers = #tpu.dot_dimension_numbers<[1], [0], [0], [1], [0, 0, 1, 1], [], []>} : vector<16x16xbf16>, vector<16x128xbf16>, vector<16x128xf32> -> vector<16x128xf32>
    %29 = arith.truncf %28 : vector<16x128xf32> to vector<16x128xbf16>
    %cst_17 = arith.constant dense<0.000000e+00> : vector<8x128xf32>
    %30 = tpu.matmul %0, %29, %cst_17 {dimension_numbers = #tpu.dot_dimension_numbers<[1], [0], [0], [1], [0, 0, 1, 1], [], []>} : vector<8x16xbf16>, vector<16x128xbf16>, vector<8x128xf32> -> vector<8x128xf32>
    %31 = arith.index_cast %c2_i32 : i32 to index
    %c0_18 = arith.constant 0 : index
    %c0_19 = arith.constant 0 : index
    %32 = vector.load %arg4[%31, %c0_18, %c0_19] : memref<8x8x128xf32, #tpu.memory_space<vmem>>, vector<1x8x128xf32>
    %33 = vector.shape_cast %32 : vector<1x8x128xf32> to vector<8x128xf32>
    %34 = vector.shape_cast %30 : vector<8x128xf32> to vector<1x8x128xf32>
    tpu.vector_store %arg4[%31, %c0_18, %c0_19], %34 {strides = array<i32>} : memref<8x8x128xf32, #tpu.memory_space<vmem>>, vector<1x8x128xf32>,
    %c3_i32 = arith.constant 3 : i32
    %35 = arith.index_cast %c3_i32 : i32 to index
    %c0_20 = arith.constant 0 : index
    %c0_21 = arith.constant 0 : index
    %36 = vector.load %arg3[%35, %c0_20, %c0_21] : memref<8x16x16xf32, #tpu.memory_space<vmem>>, vector<1x16x16xf32>
    %37 = vector.shape_cast %36 : vector<1x16x16xf32> to vector<16x16xf32>
    %38 = arith.truncf %37 : vector<16x16xf32> to vector<16x16xbf16>
    %cst_22 = arith.constant dense<0.000000e+00> : vector<16x128xf32>
    %39 = tpu.matmul %38, %1, %cst_22 {dimension_numbers = #tpu.dot_dimension_numbers<[1], [0], [0], [1], [0, 0, 1, 1], [], []>} : vector<16x16xbf16>, vector<16x128xbf16>, vector<16x128xf32> -> vector<16x128xf32>
    %40 = arith.truncf %39 : vector<16x128xf32> to vector<16x128xbf16>
    %cst_23 = arith.constant dense<0.000000e+00> : vector<8x128xf32>
    %41 = tpu.matmul %0, %40, %cst_23 {dimension_numbers = #tpu.dot_dimension_numbers<[1], [0], [0], [1], [0, 0, 1, 1], [], []>} : vector<8x16xbf16>, vector<16x128xbf16>, vector<8x128xf32> -> vector<8x128xf32>
    %42 = arith.index_cast %c3_i32 : i32 to index
    %c0_24 = arith.constant 0 : index
    %c0_25 = arith.constant 0 : index
    %43 = vector.load %arg4[%42, %c0_24, %c0_25] : memref<8x8x128xf32, #tpu.memory_space<vmem>>, vector<1x8x128xf32>
    %44 = vector.shape_cast %43 : vector<1x8x128xf32> to vector<8x128xf32>
    %45 = vector.shape_cast %41 : vector<8x128xf32> to vector<1x8x128xf32>
    tpu.vector_store %arg4[%42, %c0_24, %c0_25], %45 {strides = array<i32>} : memref<8x8x128xf32, #tpu.memory_space<vmem>>, vector<1x8x128xf32>,
    %c4_i32 = arith.constant 4 : i32
    %46 = arith.index_cast %c4_i32 : i32 to index
    %c0_26 = arith.constant 0 : index
    %c0_27 = arith.constant 0 : index
    %47 = vector.load %arg3[%46, %c0_26, %c0_27] : memref<8x16x16xf32, #tpu.memory_space<vmem>>, vector<1x16x16xf32>
    %48 = vector.shape_cast %47 : vector<1x16x16xf32> to vector<16x16xf32>
    %49 = arith.truncf %48 : vector<16x16xf32> to vector<16x16xbf16>
    %cst_28 = arith.constant dense<0.000000e+00> : vector<16x128xf32>
    %50 = tpu.matmul %49, %1, %cst_28 {dimension_numbers = #tpu.dot_dimension_numbers<[1], [0], [0], [1], [0, 0, 1, 1], [], []>} : vector<16x16xbf16>, vector<16x128xbf16>, vector<16x128xf32> -> vector<16x128xf32>
    %51 = arith.truncf %50 : vector<16x128xf32> to vector<16x128xbf16>
    %cst_29 = arith.constant dense<0.000000e+00> : vector<8x128xf32>
    %52 = tpu.matmul %0, %51, %cst_29 {dimension_numbers = #tpu.dot_dimension_numbers<[1], [0], [0], [1], [0, 0, 1, 1], [], []>} : vector<8x16xbf16>, vector<16x128xbf16>, vector<8x128xf32> -> vector<8x128xf32>
    %53 = arith.index_cast %c4_i32 : i32 to index
    %c0_30 = arith.constant 0 : index
    %c0_31 = arith.constant 0 : index
    %54 = vector.load %arg4[%53, %c0_30, %c0_31] : memref<8x8x128xf32, #tpu.memory_space<vmem>>, vector<1x8x128xf32>
    %55 = vector.shape_cast %54 : vector<1x8x128xf32> to vector<8x128xf32>
    %56 = vector.shape_cast %52 : vector<8x128xf32> to vector<1x8x128xf32>
    tpu.vector_store %arg4[%53, %c0_30, %c0_31], %56 {strides = array<i32>} : memref<8x8x128xf32, #tpu.memory_space<vmem>>, vector<1x8x128xf32>,
    %c5_i32 = arith.constant 5 : i32
    %57 = arith.index_cast %c5_i32 : i32 to index
    %c0_32 = arith.constant 0 : index
    %c0_33 = arith.constant 0 : index
    %58 = vector.load %arg3[%57, %c0_32, %c0_33] : memref<8x16x16xf32, #tpu.memory_space<vmem>>, vector<1x16x16xf32>
    %59 = vector.shape_cast %58 : vector<1x16x16xf32> to vector<16x16xf32>
    %60 = arith.truncf %59 : vector<16x16xf32> to vector<16x16xbf16>
    %cst_34 = arith.constant dense<0.000000e+00> : vector<16x128xf32>
    %61 = tpu.matmul %60, %1, %cst_34 {dimension_numbers = #tpu.dot_dimension_numbers<[1], [0], [0], [1], [0, 0, 1, 1], [], []>} : vector<16x16xbf16>, vector<16x128xbf16>, vector<16x128xf32> -> vector<16x128xf32>
    %62 = arith.truncf %61 : vector<16x128xf32> to vector<16x128xbf16>
    %cst_35 = arith.constant dense<0.000000e+00> : vector<8x128xf32>
    %63 = tpu.matmul %0, %62, %cst_35 {dimension_numbers = #tpu.dot_dimension_numbers<[1], [0], [0], [1], [0, 0, 1, 1], [], []>} : vector<8x16xbf16>, vector<16x128xbf16>, vector<8x128xf32> -> vector<8x128xf32>
    %64 = arith.index_cast %c5_i32 : i32 to index
    %c0_36 = arith.constant 0 : index
    %c0_37 = arith.constant 0 : index
    %65 = vector.load %arg4[%64, %c0_36, %c0_37] : memref<8x8x128xf32, #tpu.memory_space<vmem>>, vector<1x8x128xf32>
    %66 = vector.shape_cast %65 : vector<1x8x128xf32> to vector<8x128xf32>
    %67 = vector.shape_cast %63 : vector<8x128xf32> to vector<1x8x128xf32>
    tpu.vector_store %arg4[%64, %c0_36, %c0_37], %67 {strides = array<i32>} : memref<8x8x128xf32, #tpu.memory_space<vmem>>, vector<1x8x128xf32>,
    %c6_i32 = arith.constant 6 : i32
    %68 = arith.index_cast %c6_i32 : i32 to index
    %c0_38 = arith.constant 0 : index
    %c0_39 = arith.constant 0 : index
    %69 = vector.load %arg3[%68, %c0_38, %c0_39] : memref<8x16x16xf32, #tpu.memory_space<vmem>>, vector<1x16x16xf32>
    %70 = vector.shape_cast %69 : vector<1x16x16xf32> to vector<16x16xf32>
    %71 = arith.truncf %70 : vector<16x16xf32> to vector<16x16xbf16>
    %cst_40 = arith.constant dense<0.000000e+00> : vector<16x128xf32>
    %72 = tpu.matmul %71, %1, %cst_40 {dimension_numbers = #tpu.dot_dimension_numbers<[1], [0], [0], [1], [0, 0, 1, 1], [], []>} : vector<16x16xbf16>, vector<16x128xbf16>, vector<16x128xf32> -> vector<16x128xf32>
    %73 = arith.truncf %72 : vector<16x128xf32> to vector<16x128xbf16>
    %cst_41 = arith.constant dense<0.000000e+00> : vector<8x128xf32>
    %74 = tpu.matmul %0, %73, %cst_41 {dimension_numbers = #tpu.dot_dimension_numbers<[1], [0], [0], [1], [0, 0, 1, 1], [], []>} : vector<8x16xbf16>, vector<16x128xbf16>, vector<8x128xf32> -> vector<8x128xf32>
    %75 = arith.index_cast %c6_i32 : i32 to index
    %c0_42 = arith.constant 0 : index
    %c0_43 = arith.constant 0 : index
    %76 = vector.load %arg4[%75, %c0_42, %c0_43] : memref<8x8x128xf32, #tpu.memory_space<vmem>>, vector<1x8x128xf32>
    %77 = vector.shape_cast %76 : vector<1x8x128xf32> to vector<8x128xf32>
    %78 = vector.shape_cast %74 : vector<8x128xf32> to vector<1x8x128xf32>
    tpu.vector_store %arg4[%75, %c0_42, %c0_43], %78 {strides = array<i32>} : memref<8x8x128xf32, #tpu.memory_space<vmem>>, vector<1x8x128xf32>,
    %c7_i32 = arith.constant 7 : i32
    %79 = arith.index_cast %c7_i32 : i32 to index
    %c0_44 = arith.constant 0 : index
    %c0_45 = arith.constant 0 : index
    %80 = vector.load %arg3[%79, %c0_44, %c0_45] : memref<8x16x16xf32, #tpu.memory_space<vmem>>, vector<1x16x16xf32>
    %81 = vector.shape_cast %80 : vector<1x16x16xf32> to vector<16x16xf32>
    %82 = arith.truncf %81 : vector<16x16xf32> to vector<16x16xbf16>
    %cst_46 = arith.constant dense<0.000000e+00> : vector<16x128xf32>
    %83 = tpu.matmul %82, %1, %cst_46 {dimension_numbers = #tpu.dot_dimension_numbers<[1], [0], [0], [1], [0, 0, 1, 1], [], []>} : vector<16x16xbf16>, vector<16x128xbf16>, vector<16x128xf32> -> vector<16x128xf32>
    %84 = arith.truncf %83 : vector<16x128xf32> to vector<16x128xbf16>
    %cst_47 = arith.constant dense<0.000000e+00> : vector<8x128xf32>
    %85 = tpu.matmul %0, %84, %cst_47 {dimension_numbers = #tpu.dot_dimension_numbers<[1], [0], [0], [1], [0, 0, 1, 1], [], []>} : vector<8x16xbf16>, vector<16x128xbf16>, vector<8x128xf32> -> vector<8x128xf32>
    %86 = arith.index_cast %c7_i32 : i32 to index
    %c0_48 = arith.constant 0 : index
    %c0_49 = arith.constant 0 : index
    %87 = vector.load %arg4[%86, %c0_48, %c0_49] : memref<8x8x128xf32, #tpu.memory_space<vmem>>, vector<1x8x128xf32>
    %88 = vector.shape_cast %87 : vector<1x8x128xf32> to vector<8x128xf32>
    %89 = vector.shape_cast %85 : vector<8x128xf32> to vector<1x8x128xf32>
    tpu.vector_store %arg4[%86, %c0_48, %c0_49], %89 {strides = array<i32>} : memref<8x8x128xf32, #tpu.memory_space<vmem>>, vector<1x8x128xf32>,
    %c8_i32 = arith.constant 8 : i32
    return
  }
  func.func @transform_0(%arg0: i32) -> (i32, i32) {
    %c0_i32 = arith.constant 0 : i32
    %c0_i32_0 = arith.constant 0 : i32
    %c0_i32_1 = arith.constant 0 : i32
    return %c0_i32, %c0_i32_0 : i32, i32
  }
  func.func @transform_1(%arg0: i32) -> (i32, i32) {
    %c0_i32 = arith.constant 0 : i32
    %c0_i32_0 = arith.constant 0 : i32
    %c0_i32_1 = arith.constant 0 : i32
    return %c0_i32, %c0_i32_0 : i32, i32
  }
  func.func @transform_2(%arg0: i32) -> (i32, i32, i32) {
    %c0_i32 = arith.constant 0 : i32
    %c0_i32_0 = arith.constant 0 : i32
    %c0_i32_1 = arith.constant 0 : i32
    return %arg0, %c0_i32, %c0_i32_0 : i32, i32, i32
  }
  func.func @transform_3(%arg0: i32) -> (i32, i32, i32) {
    %c0_i32 = arith.constant 0 : i32
    %c0_i32_0 = arith.constant 0 : i32
    %c0_i32_1 = arith.constant 0 : i32
    return %arg0, %c0_i32, %c0_i32_0 : i32, i32, i32
  }
}

</mosaic_0001>

<llo_original>
// kernel: _resize_keypt_impl.1
$region0: #{_resize_keypt_impl.1}
  #allocation0 [shape = 'u32[]', space=smem, size = 0x4, offset = 0x4, fixed_abs, tag = 'smem constant byte address 0x4 - core index']
  #allocation1 [shape = 'u32[144,128]{1,0:T(1,128)}', space=vmem, size = 0x12000, scoped, tag = 'internal scratch']
  %s0 = inlined_call_operand.vmem [shape: bf16[8,16], index: 0, kind: input, shape index: {}]
  %s1 = inlined_call_operand.vmem [shape: bf16[16,128], index: 1, kind: input, shape index: {}]
  %s2 = inlined_call_operand.hbm [shape: f32[8,16,16], index: 2, kind: input, shape index: {}]
  %s3 = inlined_call_operand.hbm [shape: f32[8,8,128], index: 3, kind: output, shape index: {}]
  %s4 = sld [smem:[#allocation0]]
  $region26: #{_resize_keypt_impl.1} parent=0
    _
  %s6 = ssub.s32 1, %s4
  %s7 = scalar_select 0, %s6, %s4
  $region1: #{_resize_keypt_impl.1} parent=0
    #allocation2 [shape = 'u8[65536]{0}', space=vmem, size = 0x10000, scoped, tag = 'input window, operand 2, single buffered']
    #allocation3 [shape = 's32[1]{0}', space=sflag, size = 0x4, scoped, tag = 'scoped memory for _resize_keypt_impl.1']
    #allocation4 [shape = 's32[1]{0}', space=sflag, size = 0x4, scoped, tag = 'scoped memory for _resize_keypt_impl.1']
    #allocation5 [shape = 'u8[32768]{0}', space=vmem, size = 0x8000, scoped, tag = 'output window, operand 0, single buffered']
    %8 = vsyncpa [#allocation3], 0
    %9 = vsyncpa [#allocation4], 0
    // Predicated region
    $region2: #{_resize_keypt_impl.1} parent=1 // pred_check
      _
    $region3: #{_resize_keypt_impl.1} parent=1 // pred_check_branch
      %11 = sbr.rel (0) target = $region5
    $region4: #{_resize_keypt_impl.1} parent=1 // pred_region
      _
    $region5: #{_resize_keypt_impl.1} parent=1 // pred_fallthru
      _
    // Predicated region
    $region6: #{_resize_keypt_impl.1} parent=1 // pred_check
      _
    $region7: #{_resize_keypt_impl.1} parent=1 // pred_check_branch
      %13 = sbr.rel (0) target = $region9
    $region8: #{_resize_keypt_impl.1} parent=1 // pred_region
      _
    $region9: #{_resize_keypt_impl.1} parent=1 // pred_fallthru
      _
    // Predicated region
    $region10: #{_resize_keypt_impl.1} parent=1 // pred_check
      _
    $region11: #{_resize_keypt_impl.1} parent=1 // pred_check_branch
      %15 = sbr.rel (0) target = $region13
    $region12: #{_resize_keypt_impl.1} parent=1 // pred_region
      %s17 = ssub.s32 2048, 2048
      %18 = vsyncadd [#allocation3], %s17
      %s19 = sshll.u32 [#allocation2], 4
      %s20 = int_to_ptr.vmem [resolvable:$true] %s19
      %25 = dma.hbm_to_vmem [thread:$0]  %s2, 2048, %s20, [#allocation3], 128, 128, 8
    $region13: #{_resize_keypt_impl.1} parent=1 // pred_fallthru
      _
    // Predicated region
    $region14: #{_resize_keypt_impl.1} parent=1 // pred_check
      _
    $region15: #{_resize_keypt_impl.1} parent=1 // pred_check_branch
      %27 = sbr.rel (0) target = $region17
    $region16: #{_resize_keypt_impl.1} parent=1 // pred_region
      %28 = dma.done [#allocation3], 2048
    $region17: #{_resize_keypt_impl.1} parent=1 // pred_fallthru
      _
    %v30 = vld [vmem:[%s0] sm:$0xf]
    %v31 = vld [vmem:[%s1] sm:$0xf]
    %v32 = vld [vmem:[%s1 + $0x4] sm:$0xf]
    %v33 = vld [vmem:[#allocation2] sm:$0xff]
    %v34 = vld [vmem:[#allocation2 + $0x8] sm:$0xff]
    %v35 = vpack.c.bf16 %v34, %v33
    %v38 = vunpack.c.l.b16 %v31
    %v39 = vunpack.c.l.b16 %v32
    %v40 = vpack.c.b16 %v39, %v38
    %vm42 = vcmask 130048
    %v44 = vsel %vm42, %v35, 0
    %46 = vmatprep.subr.bf16.mxu0 0
    %47 = vmatpush1.bf16.msra.mxu0 0
    %48 = vmatprep.subr.bf16.mxu0 0
    %49 = vmatpush1.bf16.msra.mxu0 0
    %50 = vmatprep.subr.bf16.mxu0 0
    %51 = vmatpush1.bf16.msra.mxu0 0
    %52 = vmatprep.subr.bf16.mxu0 0
    %53 = vmatpush1.bf16.msra.mxu0 0
    %54 = vmatprep.subr.bf16.mxu0 0
    %55 = vmatpush1.bf16.msra.mxu0 0
    %56 = vmatprep.subr.bf16.mxu0 0
    %57 = vmatpush1.bf16.msra.mxu0 0
    %58 = vmatprep.subr.bf16.mxu0 0
    %59 = vmatpush1.bf16.msra.mxu0 0
    %60 = vmatprep.subr.bf16.mxu0 0
    %61 = vmatpush1.bf16.msra.mxu0 %v40
    %62 = vmatprep.subr.bf16.mxu0 0
    %63 = vmatpush2.bf16.msra.mxu0 0
    %64 = vmatprep.subr.bf16.mxu0 0
    %65 = vmatpush2.bf16.msra.mxu0 0
    %66 = vmatprep.subr.bf16.mxu0 0
    %67 = vmatpush2.bf16.msra.mxu0 0
    %68 = vmatprep.subr.bf16.mxu0 0
    %69 = vmatpush2.bf16.msra.mxu0 0
    %70 = vmatprep.subr.bf16.mxu0 0
    %71 = vmatpush2.bf16.msra.mxu0 0
    %72 = vmatprep.subr.bf16.mxu0 0
    %73 = vmatpush2.bf16.msra.mxu0 0
    %74 = vmatprep.subr.bf16.mxu0 0
    %75 = vmatpush2.bf16.msra.mxu0 0
    %76 = vmatprep.subr.bf16.mxu0 0
    %77 = vmatpush2.bf16.msra.mxu0 0
    %78 = vmatprep.mubr.bf16.mxu0 0
    %79 = vmatmul.mubr.bf16.gmra.mxu0 %v44
    %v80 = vpop.f32.mrf.mxu0
    %v81 = vadd.f32 0.0, %v80
    %v82 = vpop.f32.mrf.mxu0
    %v83 = vpop.f32.mrf.mxu0
    %v84 = vadd.f32 0.0, %v83
    %v85 = vpop.f32.mrf.mxu0
    %86 = vdwg.mxu0
    %v87 = vpack.c.bf16 %v84, %v81
    %v89 = vsel %vm42, %v30, 0
    %91 = vmatprep.subr.bf16.mxu0 0
    %92 = vmatpush1.bf16.msra.mxu0 0
    %93 = vmatprep.subr.bf16.mxu0 0
    %94 = vmatpush1.bf16.msra.mxu0 0
    %95 = vmatprep.subr.bf16.mxu0 0
    %96 = vmatpush1.bf16.msra.mxu0 0
    %97 = vmatprep.subr.bf16.mxu0 0
    %98 = vmatpush1.bf16.msra.mxu0 0
    %99 = vmatprep.subr.bf16.mxu0 0
    %100 = vmatpush1.bf16.msra.mxu0 0
    %101 = vmatprep.subr.bf16.mxu0 0
    %102 = vmatpush1.bf16.msra.mxu0 0
    %103 = vmatprep.subr.bf16.mxu0 0
    %104 = vmatpush1.bf16.msra.mxu0 0
    %105 = vmatprep.subr.bf16.mxu0 0
    %106 = vmatpush1.bf16.msra.mxu0 %v87
    %107 = vmatprep.subr.bf16.mxu0 0
    %108 = vmatpush2.bf16.msra.mxu0 0
    %109 = vmatprep.subr.bf16.mxu0 0
    %110 = vmatpush2.bf16.msra.mxu0 0
    %111 = vmatprep.subr.bf16.mxu0 0
    %112 = vmatpush2.bf16.msra.mxu0 0
    %113 = vmatprep.subr.bf16.mxu0 0
    %114 = vmatpush2.bf16.msra.mxu0 0
    %115 = vmatprep.subr.bf16.mxu0 0
    %116 = vmatpush2.bf16.msra.mxu0 0
    %117 = vmatprep.subr.bf16.mxu0 0
    %118 = vmatpush2.bf16.msra.mxu0 0
    %119 = vmatprep.subr.bf16.mxu0 0
    %120 = vmatpush2.bf16.msra.mxu0 0
    %121 = vmatprep.subr.bf16.mxu0 0
    %122 = vmatpush2.bf16.msra.mxu0 0
    %123 = vmatprep.mubr.bf16.mxu0 0
    %124 = vmatmul.mubr.bf16.gmra.mxu0 %v89
    %v125 = vpop.f32.mrf.mxu0
    %v126 = vadd.f32 0.0, %v125
    %v127 = vpop.f32.mrf.mxu0
    %v128 = vpop.f32.mrf.mxu0
    %v129 = vpop.f32.mrf.mxu0
    %130 = vdwg.mxu0
    %131 = vst [vmem:[#allocation5] sm:$0xff] %v126
    %s132 = scalar_lea.vmem [#allocation2], 16
    %v133 = vld [vmem:[%s132] sm:$0xff]
    %v134 = vld [vmem:[%s132 + $0x8] sm:$0xff]
    %v135 = vpack.c.bf16 %v134, %v133
    %v137 = vsel %vm42, %v135, 0
    %139 = vmatprep.subr.bf16.mxu0 0
    %140 = vmatpush1.bf16.msra.mxu0 0
    %141 = vmatprep.subr.bf16.mxu0 0
    %142 = vmatpush1.bf16.msra.mxu0 0
    %143 = vmatprep.subr.bf16.mxu0 0
    %144 = vmatpush1.bf16.msra.mxu0 0
    %145 = vmatprep.subr.bf16.mxu0 0
    %146 = vmatpush1.bf16.msra.mxu0 0
    %147 = vmatprep.subr.bf16.mxu0 0
    %148 = vmatpush1.bf16.msra.mxu0 0
    %149 = vmatprep.subr.bf16.mxu0 0
    %150 = vmatpush1.bf16.msra.mxu0 0
    %151 = vmatprep.subr.bf16.mxu0 0
    %152 = vmatpush1.bf16.msra.mxu0 0
    %153 = vmatprep.subr.bf16.mxu0 0
    %154 = vmatpush1.bf16.msra.mxu0 %v40
    %155 = vmatprep.subr.bf16.mxu0 0
    %156 = vmatpush2.bf16.msra.mxu0 0
    %157 = vmatprep.subr.bf16.mxu0 0
    %158 = vmatpush2.bf16.msra.mxu0 0
    %159 = vmatprep.subr.bf16.mxu0 0
    %160 = vmatpush2.bf16.msra.mxu0 0
    %161 = vmatprep.subr.bf16.mxu0 0
    %162 = vmatpush2.bf16.msra.mxu0 0
    %163 = vmatprep.subr.bf16.mxu0 0
    %164 = vmatpush2.bf16.msra.mxu0 0
    %165 = vmatprep.subr.bf16.mxu0 0
    %166 = vmatpush2.bf16.msra.mxu0 0
    %167 = vmatprep.subr.bf16.mxu0 0
    %168 = vmatpush2.bf16.msra.mxu0 0
    %169 = vmatprep.subr.bf16.mxu0 0
    %170 = vmatpush2.bf16.msra.mxu0 0
    %171 = vmatprep.mubr.bf16.mxu0 0
    %172 = vmatmul.mubr.bf16.gmra.mxu0 %v137
    %v173 = vpop.f32.mrf.mxu0
    %v174 = vadd.f32 0.0, %v173
    %v175 = vpop.f32.mrf.mxu0
    %v176 = vpop.f32.mrf.mxu0
    %v177 = vadd.f32 0.0, %v176
    %v178 = vpop.f32.mrf.mxu0
    %179 = vdwg.mxu0
    %v180 = vpack.c.bf16 %v177, %v174
    %181 = vmatprep.subr.bf16.mxu0 0
    %182 = vmatpush1.bf16.msra.mxu0 0
    %183 = vmatprep.subr.bf16.mxu0 0
    %184 = vmatpush1.bf16.msra.mxu0 0
    %185 = vmatprep.subr.bf16.mxu0 0
    %186 = vmatpush1.bf16.msra.mxu0 0
    %187 = vmatprep.subr.bf16.mxu0 0
    %188 = vmatpush1.bf16.msra.mxu0 0
    %189 = vmatprep.subr.bf16.mxu0 0
    %190 = vmatpush1.bf16.msra.mxu0 0
    %191 = vmatprep.subr.bf16.mxu0 0
    %192 = vmatpush1.bf16.msra.mxu0 0
    %193 = vmatprep.subr.bf16.mxu0 0
    %194 = vmatpush1.bf16.msra.mxu0 0
    %195 = vmatprep.subr.bf16.mxu0 0
    %196 = vmatpush1.bf16.msra.mxu0 %v180
    %197 = vmatprep.subr.bf16.mxu0 0
    %198 = vmatpush2.bf16.msra.mxu0 0
    %199 = vmatprep.subr.bf16.mxu0 0
    %200 = vmatpush2.bf16.msra.mxu0 0
    %201 = vmatprep.subr.bf16.mxu0 0
    %202 = vmatpush2.bf16.msra.mxu0 0
    %203 = vmatprep.subr.bf16.mxu0 0
    %204 = vmatpush2.bf16.msra.mxu0 0
    %205 = vmatprep.subr.bf16.mxu0 0
    %206 = vmatpush2.bf16.msra.mxu0 0
    %207 = vmatprep.subr.bf16.mxu0 0
    %208 = vmatpush2.bf16.msra.mxu0 0
    %209 = vmatprep.subr.bf16.mxu0 0
    %210 = vmatpush2.bf16.msra.mxu0 0
    %211 = vmatprep.subr.bf16.mxu0 0
    %212 = vmatpush2.bf16.msra.mxu0 0
    %213 = vmatprep.mubr.bf16.mxu0 0
    %214 = vmatmul.mubr.bf16.gmra.mxu0 %v89
    %v215 = vpop.f32.mrf.mxu0
    %v216 = vadd.f32 0.0, %v215
    %v217 = vpop.f32.mrf.mxu0
    %v218 = vpop.f32.mrf.mxu0
    %v219 = vpop.f32.mrf.mxu0
    %220 = vdwg.mxu0
    %s221 = scalar_lea.vmem [#allocation5], 8
    %222 = vst [vmem:[%s221] sm:$0xff] %v216
    %s223 = scalar_lea.vmem [#allocation2], 32
    %v224 = vld [vmem:[%s223] sm:$0xff]
    %v225 = vld [vmem:[%s223 + $0x8] sm:$0xff]
    %v226 = vpack.c.bf16 %v225, %v224
    %v228 = vsel %vm42, %v226, 0
    %230 = vmatprep.subr.bf16.mxu0 0
    %231 = vmatpush1.bf16.msra.mxu0 0
    %232 = vmatprep.subr.bf16.mxu0 0
    %233 = vmatpush1.bf16.msra.mxu0 0
    %234 = vmatprep.subr.bf16.mxu0 0
    %235 = vmatpush1.bf16.msra.mxu0 0
    %236 = vmatprep.subr.bf16.mxu0 0
    %237 = vmatpush1.bf16.msra.mxu0 0
    %238 = vmatprep.subr.bf16.mxu0 0
    %239 = vmatpush1.bf16.msra.mxu0 0
    %240 = vmatprep.subr.bf16.mxu0 0
    %241 = vmatpush1.bf16.msra.mxu0 0
    %242 = vmatprep.subr.bf16.mxu0 0
    %243 = vmatpush1.bf16.msra.mxu0 0
    %244 = vmatprep.subr.bf16.mxu0 0
    %245 = vmatpush1.bf16.msra.mxu0 %v40
    %246 = vmatprep.subr.bf16.mxu0 0
    %247 = vmatpush2.bf16.msra.mxu0 0
    %248 = vmatprep.subr.bf16.mxu0 0
    %249 = vmatpush2.bf16.msra.mxu0 0
    %250 = vmatprep.subr.bf16.mxu0 0
    %251 = vmatpush2.bf16.msra.mxu0 0
    %252 = vmatprep.subr.bf16.mxu0 0
    %253 = vmatpush2.bf16.msra.mxu0 0
    %254 = vmatprep.subr.bf16.mxu0 0
    %255 = vmatpush2.bf16.msra.mxu0 0
    %256 = vmatprep.subr.bf16.mxu0 0
    %257 = vmatpush2.bf16.msra.mxu0 0
    %258 = vmatprep.subr.bf16.mxu0 0
    %259 = vmatpush2.bf16.msra.mxu0 0
    %260 = vmatprep.subr.bf16.mxu0 0
    %261 = vmatpush2.bf16.msra.mxu0 0
    %262 = vmatprep.mubr.bf16.mxu0 0
    %263 = vmatmul.mubr.bf16.gmra.mxu0 %v228
    %v264 = vpop.f32.mrf.mxu0
    %v265 = vadd.f32 0.0, %v264
    %v266 = vpop.f32.mrf.mxu0
    %v267 = vpop.f32.mrf.mxu0
    %v268 = vadd.f32 0.0, %v267
    %v269 = vpop.f32.mrf.mxu0
    %270 = vdwg.mxu0
    %v271 = vpack.c.bf16 %v268, %v265
    %272 = vmatprep.subr.bf16.mxu0 0
    %273 = vmatpush1.bf16.msra.mxu0 0
    %274 = vmatprep.subr.bf16.mxu0 0
    %275 = vmatpush1.bf16.msra.mxu0 0
    %276 = vmatprep.subr.bf16.mxu0 0
    %277 = vmatpush1.bf16.msra.mxu0 0
    %278 = vmatprep.subr.bf16.mxu0 0
    %279 = vmatpush1.bf16.msra.mxu0 0
    %280 = vmatprep.subr.bf16.mxu0 0
    %281 = vmatpush1.bf16.msra.mxu0 0
    %282 = vmatprep.subr.bf16.mxu0 0
    %283 = vmatpush1.bf16.msra.mxu0 0
    %284 = vmatprep.subr.bf16.mxu0 0
    %285 = vmatpush1.bf16.msra.mxu0 0
    %286 = vmatprep.subr.bf16.mxu0 0
    %287 = vmatpush1.bf16.msra.mxu0 %v271
    %288 = vmatprep.subr.bf16.mxu0 0
    %289 = vmatpush2.bf16.msra.mxu0 0
    %290 = vmatprep.subr.bf16.mxu0 0
    %291 = vmatpush2.bf16.msra.mxu0 0
    %292 = vmatprep.subr.bf16.mxu0 0
    %293 = vmatpush2.bf16.msra.mxu0 0
    %294 = vmatprep.subr.bf16.mxu0 0
    %295 = vmatpush2.bf16.msra.mxu0 0
    %296 = vmatprep.subr.bf16.mxu0 0
    %297 = vmatpush2.bf16.msra.mxu0 0
    %298 = vmatprep.subr.bf16.mxu0 0
    %299 = vmatpush2.bf16.msra.mxu0 0
    %300 = vmatprep.subr.bf16.mxu0 0
    %301 = vmatpush2.bf16.msra.mxu0 0
    %302 = vmatprep.subr.bf16.mxu0 0
    %303 = vmatpush2.bf16.msra.mxu0 0
    %304 = vmatprep.mubr.bf16.mxu0 0
    %305 = vmatmul.mubr.bf16.gmra.mxu0 %v89
    %v306 = vpop.f32.mrf.mxu0
    %v307 = vadd.f32 0.0, %v306
    %v308 = vpop.f32.mrf.mxu0
    %v309 = vpop.f32.mrf.mxu0
    %v310 = vpop.f32.mrf.mxu0
    %311 = vdwg.mxu0
    %s312 = scalar_lea.vmem [#allocation5], 16
    %313 = vst [vmem:[%s312] sm:$0xff] %v307
    %s314 = scalar_lea.vmem [#allocation2], 48
    %v315 = vld [vmem:[%s314] sm:$0xff]
    %v316 = vld [vmem:[%s314 + $0x8] sm:$0xff]
    %v317 = vpack.c.bf16 %v316, %v315
    %v319 = vsel %vm42, %v317, 0
    %321 = vmatprep.subr.bf16.mxu0 0
    %322 = vmatpush1.bf16.msra.mxu0 0
    %323 = vmatprep.subr.bf16.mxu0 0
    %324 = vmatpush1.bf16.msra.mxu0 0
    %325 = vmatprep.subr.bf16.mxu0 0
    %326 = vmatpush1.bf16.msra.mxu0 0
    %327 = vmatprep.subr.bf16.mxu0 0
    %328 = vmatpush1.bf16.msra.mxu0 0
    %329 = vmatprep.subr.bf16.mxu0 0
    %330 = vmatpush1.bf16.msra.mxu0 0
    %331 = vmatprep.subr.bf16.mxu0 0
    %332 = vmatpush1.bf16.msra.mxu0 0
    %333 = vmatprep.subr.bf16.mxu0 0
    %334 = vmatpush1.bf16.msra.mxu0 0
    %335 = vmatprep.subr.bf16.mxu0 0
    %336 = vmatpush1.bf16.msra.mxu0 %v40
    %337 = vmatprep.subr.bf16.mxu0 0
    %338 = vmatpush2.bf16.msra.mxu0 0
    %339 = vmatprep.subr.bf16.mxu0 0
    %340 = vmatpush2.bf16.msra.mxu0 0
    %341 = vmatprep.subr.bf16.mxu0 0
    %342 = vmatpush2.bf16.msra.mxu0 0
    %343 = vmatprep.subr.bf16.mxu0 0
    %344 = vmatpush2.bf16.msra.mxu0 0
    %345 = vmatprep.subr.bf16.mxu0 0
    %346 = vmatpush2.bf16.msra.mxu0 0
    %347 = vmatprep.subr.bf16.mxu0 0
    %348 = vmatpush2.bf16.msra.mxu0 0
    %349 = vmatprep.subr.bf16.mxu0 0
    %350 = vmatpush2.bf16.msra.mxu0 0
    %351 = vmatprep.subr.bf16.mxu0 0
    %352 = vmatpush2.bf16.msra.mxu0 0
    %353 = vmatprep.mubr.bf16.mxu0 0
    %354 = vmatmul.mubr.bf16.gmra.mxu0 %v319
    %v355 = vpop.f32.mrf.mxu0
    %v356 = vadd.f32 0.0, %v355
    %v357 = vpop.f32.mrf.mxu0
    %v358 = vpop.f32.mrf.mxu0
    %v359 = vadd.f32 0.0, %v358
    %v360 = vpop.f32.mrf.mxu0
    %361 = vdwg.mxu0
    %v362 = vpack.c.bf16 %v359, %v356
    %363 = vmatprep.subr.bf16.mxu0 0
    %364 = vmatpush1.bf16.msra.mxu0 0
    %365 = vmatprep.subr.bf16.mxu0 0
    %366 = vmatpush1.bf16.msra.mxu0 0
    %367 = vmatprep.subr.bf16.mxu0 0
    %368 = vmatpush1.bf16.msra.mxu0 0
    %369 = vmatprep.subr.bf16.mxu0 0
    %370 = vmatpush1.bf16.msra.mxu0 0
    %371 = vmatprep.subr.bf16.mxu0 0
    %372 = vmatpush1.bf16.msra.mxu0 0
    %373 = vmatprep.subr.bf16.mxu0 0
    %374 = vmatpush1.bf16.msra.mxu0 0
    %375 = vmatprep.subr.bf16.mxu0 0
    %376 = vmatpush1.bf16.msra.mxu0 0
    %377 = vmatprep.subr.bf16.mxu0 0
    %378 = vmatpush1.bf16.msra.mxu0 %v362
    %379 = vmatprep.subr.bf16.mxu0 0
    %380 = vmatpush2.bf16.msra.mxu0 0
    %381 = vmatprep.subr.bf16.mxu0 0
    %382 = vmatpush2.bf16.msra.mxu0 0
    %383 = vmatprep.subr.bf16.mxu0 0
    %384 = vmatpush2.bf16.msra.mxu0 0
    %385 = vmatprep.subr.bf16.mxu0 0
    %386 = vmatpush2.bf16.msra.mxu0 0
    %387 = vmatprep.subr.bf16.mxu0 0
    %388 = vmatpush2.bf16.msra.mxu0 0
    %389 = vmatprep.subr.bf16.mxu0 0
    %390 = vmatpush2.bf16.msra.mxu0 0
    %391 = vmatprep.subr.bf16.mxu0 0
    %392 = vmatpush2.bf16.msra.mxu0 0
    %393 = vmatprep.subr.bf16.mxu0 0
    %394 = vmatpush2.bf16.msra.mxu0 0
    %395 = vmatprep.mubr.bf16.mxu0 0
    %396 = vmatmul.mubr.bf16.gmra.mxu0 %v89
    %v397 = vpop.f32.mrf.mxu0
    %v398 = vadd.f32 0.0, %v397
    %v399 = vpop.f32.mrf.mxu0
    %v400 = vpop.f32.mrf.mxu0
    %v401 = vpop.f32.mrf.mxu0
    %402 = vdwg.mxu0
    %s403 = scalar_lea.vmem [#allocation5], 24
    %404 = vst [vmem:[%s403] sm:$0xff] %v398
    %s405 = scalar_lea.vmem [#allocation2], 64
    %v406 = vld [vmem:[%s405] sm:$0xff]
    %v407 = vld [vmem:[%s405 + $0x8] sm:$0xff]
    %v408 = vpack.c.bf16 %v407, %v406
    %v410 = vsel %vm42, %v408, 0
    %412 = vmatprep.subr.bf16.mxu0 0
    %413 = vmatpush1.bf16.msra.mxu0 0
    %414 = vmatprep.subr.bf16.mxu0 0
    %415 = vmatpush1.bf16.msra.mxu0 0
    %416 = vmatprep.subr.bf16.mxu0 0
    %417 = vmatpush1.bf16.msra.mxu0 0
    %418 = vmatprep.subr.bf16.mxu0 0
    %419 = vmatpush1.bf16.msra.mxu0 0
    %420 = vmatprep.subr.bf16.mxu0 0
    %421 = vmatpush1.bf16.msra.mxu0 0
    %422 = vmatprep.subr.bf16.mxu0 0
    %423 = vmatpush1.bf16.msra.mxu0 0
    %424 = vmatprep.subr.bf16.mxu0 0
    %425 = vmatpush1.bf16.msra.mxu0 0
    %426 = vmatprep.subr.bf16.mxu0 0
    %427 = vmatpush1.bf16.msra.mxu0 %v40
    %428 = vmatprep.subr.bf16.mxu0 0
    %429 = vmatpush2.bf16.msra.mxu0 0
    %430 = vmatprep.subr.bf16.mxu0 0
    %431 = vmatpush2.bf16.msra.mxu0 0
    %432 = vmatprep.subr.bf16.mxu0 0
    %433 = vmatpush2.bf16.msra.mxu0 0
    %434 = vmatprep.subr.bf16.mxu0 0
    %435 = vmatpush2.bf16.msra.mxu0 0
    %436 = vmatprep.subr.bf16.mxu0 0
    %437 = vmatpush2.bf16.msra.mxu0 0
    %438 = vmatprep.subr.bf16.mxu0 0
    %439 = vmatpush2.bf16.msra.mxu0 0
    %440 = vmatprep.subr.bf16.mxu0 0
    %441 = vmatpush2.bf16.msra.mxu0 0
    %442 = vmatprep.subr.bf16.mxu0 0
    %443 = vmatpush2.bf16.msra.mxu0 0
    %444 = vmatprep.mubr.bf16.mxu0 0
    %445 = vmatmul.mubr.bf16.gmra.mxu0 %v410
    %v446 = vpop.f32.mrf.mxu0
    %v447 = vadd.f32 0.0, %v446
    %v448 = vpop.f32.mrf.mxu0
    %v449 = vpop.f32.mrf.mxu0
    %v450 = vadd.f32 0.0, %v449
    %v451 = vpop.f32.mrf.mxu0
    %452 = vdwg.mxu0
    %v453 = vpack.c.bf16 %v450, %v447
    %454 = vmatprep.subr.bf16.mxu0 0
    %455 = vmatpush1.bf16.msra.mxu0 0
    %456 = vmatprep.subr.bf16.mxu0 0
    %457 = vmatpush1.bf16.msra.mxu0 0
    %458 = vmatprep.subr.bf16.mxu0 0
    %459 = vmatpush1.bf16.msra.mxu0 0
    %460 = vmatprep.subr.bf16.mxu0 0
    %461 = vmatpush1.bf16.msra.mxu0 0
    %462 = vmatprep.subr.bf16.mxu0 0
    %463 = vmatpush1.bf16.msra.mxu0 0
    %464 = vmatprep.subr.bf16.mxu0 0
    %465 = vmatpush1.bf16.msra.mxu0 0
    %466 = vmatprep.subr.bf16.mxu0 0
    %467 = vmatpush1.bf16.msra.mxu0 0
    %468 = vmatprep.subr.bf16.mxu0 0
    %469 = vmatpush1.bf16.msra.mxu0 %v453
    %470 = vmatprep.subr.bf16.mxu0 0
    %471 = vmatpush2.bf16.msra.mxu0 0
    %472 = vmatprep.subr.bf16.mxu0 0
    %473 = vmatpush2.bf16.msra.mxu0 0
    %474 = vmatprep.subr.bf16.mxu0 0
    %475 = vmatpush2.bf16.msra.mxu0 0
    %476 = vmatprep.subr.bf16.mxu0 0
    %477 = vmatpush2.bf16.msra.mxu0 0
    %478 = vmatprep.subr.bf16.mxu0 0
    %479 = vmatpush2.bf16.msra.mxu0 0
    %480 = vmatprep.subr.bf16.mxu0 0
    %481 = vmatpush2.bf16.msra.mxu0 0
    %482 = vmatprep.subr.bf16.mxu0 0
    %483 = vmatpush2.bf16.msra.mxu0 0
    %484 = vmatprep.subr.bf16.mxu0 0
    %485 = vmatpush2.bf16.msra.mxu0 0
    %486 = vmatprep.mubr.bf16.mxu0 0
    %487 = vmatmul.mubr.bf16.gmra.mxu0 %v89
    %v488 = vpop.f32.mrf.mxu0
    %v489 = vadd.f32 0.0, %v488
    %v490 = vpop.f32.mrf.mxu0
    %v491 = vpop.f32.mrf.mxu0
    %v492 = vpop.f32.mrf.mxu0
    %493 = vdwg.mxu0
    %s494 = scalar_lea.vmem [#allocation5], 32
    %495 = vst [vmem:[%s494] sm:$0xff] %v489
    %s496 = scalar_lea.vmem [#allocation2], 80
    %v497 = vld [vmem:[%s496] sm:$0xff]
    %v498 = vld [vmem:[%s496 + $0x8] sm:$0xff]
    %v499 = vpack.c.bf16 %v498, %v497
    %v501 = vsel %vm42, %v499, 0
    %503 = vmatprep.subr.bf16.mxu0 0
    %504 = vmatpush1.bf16.msra.mxu0 0
    %505 = vmatprep.subr.bf16.mxu0 0
    %506 = vmatpush1.bf16.msra.mxu0 0
    %507 = vmatprep.subr.bf16.mxu0 0
    %508 = vmatpush1.bf16.msra.mxu0 0
    %509 = vmatprep.subr.bf16.mxu0 0
    %510 = vmatpush1.bf16.msra.mxu0 0
    %511 = vmatprep.subr.bf16.mxu0 0
    %512 = vmatpush1.bf16.msra.mxu0 0
    %513 = vmatprep.subr.bf16.mxu0 0
    %514 = vmatpush1.bf16.msra.mxu0 0
    %515 = vmatprep.subr.bf16.mxu0 0
    %516 = vmatpush1.bf16.msra.mxu0 0
    %517 = vmatprep.subr.bf16.mxu0 0
    %518 = vmatpush1.bf16.msra.mxu0 %v40
    %519 = vmatprep.subr.bf16.mxu0 0
    %520 = vmatpush2.bf16.msra.mxu0 0
    %521 = vmatprep.subr.bf16.mxu0 0
    %522 = vmatpush2.bf16.msra.mxu0 0
    %523 = vmatprep.subr.bf16.mxu0 0
    %524 = vmatpush2.bf16.msra.mxu0 0
    %525 = vmatprep.subr.bf16.mxu0 0
    %526 = vmatpush2.bf16.msra.mxu0 0
    %527 = vmatprep.subr.bf16.mxu0 0
    %528 = vmatpush2.bf16.msra.mxu0 0
    %529 = vmatprep.subr.bf16.mxu0 0
    %530 = vmatpush2.bf16.msra.mxu0 0
    %531 = vmatprep.subr.bf16.mxu0 0
    %532 = vmatpush2.bf16.msra.mxu0 0
    %533 = vmatprep.subr.bf16.mxu0 0
    %534 = vmatpush2.bf16.msra.mxu0 0
    %535 = vmatprep.mubr.bf16.mxu0 0
    %536 = vmatmul.mubr.bf16.gmra.mxu0 %v501
    %v537 = vpop.f32.mrf.mxu0
    %v538 = vadd.f32 0.0, %v537
    %v539 = vpop.f32.mrf.mxu0
    %v540 = vpop.f32.mrf.mxu0
    %v541 = vadd.f32 0.0, %v540
    %v542 = vpop.f32.mrf.mxu0
    %543 = vdwg.mxu0
    %v544 = vpack.c.bf16 %v541, %v538
    %545 = vmatprep.subr.bf16.mxu0 0
    %546 = vmatpush1.bf16.msra.mxu0 0
    %547 = vmatprep.subr.bf16.mxu0 0
    %548 = vmatpush1.bf16.msra.mxu0 0
    %549 = vmatprep.subr.bf16.mxu0 0
    %550 = vmatpush1.bf16.msra.mxu0 0
    %551 = vmatprep.subr.bf16.mxu0 0
    %552 = vmatpush1.bf16.msra.mxu0 0
    %553 = vmatprep.subr.bf16.mxu0 0
    %554 = vmatpush1.bf16.msra.mxu0 0
    %555 = vmatprep.subr.bf16.mxu0 0
    %556 = vmatpush1.bf16.msra.mxu0 0
    %557 = vmatprep.subr.bf16.mxu0 0
    %558 = vmatpush1.bf16.msra.mxu0 0
    %559 = vmatprep.subr.bf16.mxu0 0
    %560 = vmatpush1.bf16.msra.mxu0 %v544
    %561 = vmatprep.subr.bf16.mxu0 0
    %562 = vmatpush2.bf16.msra.mxu0 0
    %563 = vmatprep.subr.bf16.mxu0 0
    %564 = vmatpush2.bf16.msra.mxu0 0
    %565 = vmatprep.subr.bf16.mxu0 0
    %566 = vmatpush2.bf16.msra.mxu0 0
    %567 = vmatprep.subr.bf16.mxu0 0
    %568 = vmatpush2.bf16.msra.mxu0 0
    %569 = vmatprep.subr.bf16.mxu0 0
    %570 = vmatpush2.bf16.msra.mxu0 0
    %571 = vmatprep.subr.bf16.mxu0 0
    %572 = vmatpush2.bf16.msra.mxu0 0
    %573 = vmatprep.subr.bf16.mxu0 0
    %574 = vmatpush2.bf16.msra.mxu0 0
    %575 = vmatprep.subr.bf16.mxu0 0
    %576 = vmatpush2.bf16.msra.mxu0 0
    %577 = vmatprep.mubr.bf16.mxu0 0
    %578 = vmatmul.mubr.bf16.gmra.mxu0 %v89
    %v579 = vpop.f32.mrf.mxu0
    %v580 = vadd.f32 0.0, %v579
    %v581 = vpop.f32.mrf.mxu0
    %v582 = vpop.f32.mrf.mxu0
    %v583 = vpop.f32.mrf.mxu0
    %584 = vdwg.mxu0
    %s585 = scalar_lea.vmem [#allocation5], 40
    %586 = vst [vmem:[%s585] sm:$0xff] %v580
    %s587 = scalar_lea.vmem [#allocation2], 96
    %v588 = vld [vmem:[%s587] sm:$0xff]
    %v589 = vld [vmem:[%s587 + $0x8] sm:$0xff]
    %v590 = vpack.c.bf16 %v589, %v588
    %v592 = vsel %vm42, %v590, 0
    %594 = vmatprep.subr.bf16.mxu0 0
    %595 = vmatpush1.bf16.msra.mxu0 0
    %596 = vmatprep.subr.bf16.mxu0 0
    %597 = vmatpush1.bf16.msra.mxu0 0
    %598 = vmatprep.subr.bf16.mxu0 0
    %599 = vmatpush1.bf16.msra.mxu0 0
    %600 = vmatprep.subr.bf16.mxu0 0
    %601 = vmatpush1.bf16.msra.mxu0 0
    %602 = vmatprep.subr.bf16.mxu0 0
    %603 = vmatpush1.bf16.msra.mxu0 0
    %604 = vmatprep.subr.bf16.mxu0 0
    %605 = vmatpush1.bf16.msra.mxu0 0
    %606 = vmatprep.subr.bf16.mxu0 0
    %607 = vmatpush1.bf16.msra.mxu0 0
    %608 = vmatprep.subr.bf16.mxu0 0
    %609 = vmatpush1.bf16.msra.mxu0 %v40
    %610 = vmatprep.subr.bf16.mxu0 0
    %611 = vmatpush2.bf16.msra.mxu0 0
    %612 = vmatprep.subr.bf16.mxu0 0
    %613 = vmatpush2.bf16.msra.mxu0 0
    %614 = vmatprep.subr.bf16.mxu0 0
    %615 = vmatpush2.bf16.msra.mxu0 0
    %616 = vmatprep.subr.bf16.mxu0 0
    %617 = vmatpush2.bf16.msra.mxu0 0
    %618 = vmatprep.subr.bf16.mxu0 0
    %619 = vmatpush2.bf16.msra.mxu0 0
    %620 = vmatprep.subr.bf16.mxu0 0
    %621 = vmatpush2.bf16.msra.mxu0 0
    %622 = vmatprep.subr.bf16.mxu0 0
    %623 = vmatpush2.bf16.msra.mxu0 0
    %624 = vmatprep.subr.bf16.mxu0 0
    %625 = vmatpush2.bf16.msra.mxu0 0
    %626 = vmatprep.mubr.bf16.mxu0 0
    %627 = vmatmul.mubr.bf16.gmra.mxu0 %v592
    %v628 = vpop.f32.mrf.mxu0
    %v629 = vadd.f32 0.0, %v628
    %v630 = vpop.f32.mrf.mxu0
    %v631 = vpop.f32.mrf.mxu0
    %v632 = vadd.f32 0.0, %v631
    %v633 = vpop.f32.mrf.mxu0
    %634 = vdwg.mxu0
    %v635 = vpack.c.bf16 %v632, %v629
    %636 = vmatprep.subr.bf16.mxu0 0
    %637 = vmatpush1.bf16.msra.mxu0 0
    %638 = vmatprep.subr.bf16.mxu0 0
    %639 = vmatpush1.bf16.msra.mxu0 0
    %640 = vmatprep.subr.bf16.mxu0 0
    %641 = vmatpush1.bf16.msra.mxu0 0
    %642 = vmatprep.subr.bf16.mxu0 0
    %643 = vmatpush1.bf16.msra.mxu0 0
    %644 = vmatprep.subr.bf16.mxu0 0
    %645 = vmatpush1.bf16.msra.mxu0 0
    %646 = vmatprep.subr.bf16.mxu0 0
    %647 = vmatpush1.bf16.msra.mxu0 0
    %648 = vmatprep.subr.bf16.mxu0 0
    %649 = vmatpush1.bf16.msra.mxu0 0
    %650 = vmatprep.subr.bf16.mxu0 0
    %651 = vmatpush1.bf16.msra.mxu0 %v635
    %652 = vmatprep.subr.bf16.mxu0 0
    %653 = vmatpush2.bf16.msra.mxu0 0
    %654 = vmatprep.subr.bf16.mxu0 0
    %655 = vmatpush2.bf16.msra.mxu0 0
    %656 = vmatprep.subr.bf16.mxu0 0
    %657 = vmatpush2.bf16.msra.mxu0 0
    %658 = vmatprep.subr.bf16.mxu0 0
    %659 = vmatpush2.bf16.msra.mxu0 0
    %660 = vmatprep.subr.bf16.mxu0 0
    %661 = vmatpush2.bf16.msra.mxu0 0
    %662 = vmatprep.subr.bf16.mxu0 0
    %663 = vmatpush2.bf16.msra.mxu0 0
    %664 = vmatprep.subr.bf16.mxu0 0
    %665 = vmatpush2.bf16.msra.mxu0 0
    %666 = vmatprep.subr.bf16.mxu0 0
    %667 = vmatpush2.bf16.msra.mxu0 0
    %668 = vmatprep.mubr.bf16.mxu0 0
    %669 = vmatmul.mubr.bf16.gmra.mxu0 %v89
    %v670 = vpop.f32.mrf.mxu0
    %v671 = vadd.f32 0.0, %v670
    %v672 = vpop.f32.mrf.mxu0
    %v673 = vpop.f32.mrf.mxu0
    %v674 = vpop.f32.mrf.mxu0
    %675 = vdwg.mxu0
    %s676 = scalar_lea.vmem [#allocation5], 48
    %677 = vst [vmem:[%s676] sm:$0xff] %v671
    %s678 = scalar_lea.vmem [#allocation2], 112
    %v679 = vld [vmem:[%s678] sm:$0xff]
    %v680 = vld [vmem:[%s678 + $0x8] sm:$0xff]
    %v681 = vpack.c.bf16 %v680, %v679
    %v683 = vsel %vm42, %v681, 0
    %685 = vmatprep.subr.bf16.mxu0 0
    %686 = vmatpush1.bf16.msra.mxu0 0
    %687 = vmatprep.subr.bf16.mxu0 0
    %688 = vmatpush1.bf16.msra.mxu0 0
    %689 = vmatprep.subr.bf16.mxu0 0
    %690 = vmatpush1.bf16.msra.mxu0 0
    %691 = vmatprep.subr.bf16.mxu0 0
    %692 = vmatpush1.bf16.msra.mxu0 0
    %693 = vmatprep.subr.bf16.mxu0 0
    %694 = vmatpush1.bf16.msra.mxu0 0
    %695 = vmatprep.subr.bf16.mxu0 0
    %696 = vmatpush1.bf16.msra.mxu0 0
    %697 = vmatprep.subr.bf16.mxu0 0
    %698 = vmatpush1.bf16.msra.mxu0 0
    %699 = vmatprep.subr.bf16.mxu0 0
    %700 = vmatpush1.bf16.msra.mxu0 %v40
    %701 = vmatprep.subr.bf16.mxu0 0
    %702 = vmatpush2.bf16.msra.mxu0 0
    %703 = vmatprep.subr.bf16.mxu0 0
    %704 = vmatpush2.bf16.msra.mxu0 0
    %705 = vmatprep.subr.bf16.mxu0 0
    %706 = vmatpush2.bf16.msra.mxu0 0
    %707 = vmatprep.subr.bf16.mxu0 0
    %708 = vmatpush2.bf16.msra.mxu0 0
    %709 = vmatprep.subr.bf16.mxu0 0
    %710 = vmatpush2.bf16.msra.mxu0 0
    %711 = vmatprep.subr.bf16.mxu0 0
    %712 = vmatpush2.bf16.msra.mxu0 0
    %713 = vmatprep.subr.bf16.mxu0 0
    %714 = vmatpush2.bf16.msra.mxu0 0
    %715 = vmatprep.subr.bf16.mxu0 0
    %716 = vmatpush2.bf16.msra.mxu0 0
    %717 = vmatprep.mubr.bf16.mxu0 0
    %718 = vmatmul.mubr.bf16.gmra.mxu0 %v683
    %v719 = vpop.f32.mrf.mxu0
    %v720 = vadd.f32 0.0, %v719
    %v721 = vpop.f32.mrf.mxu0
    %v722 = vpop.f32.mrf.mxu0
    %v723 = vadd.f32 0.0, %v722
    %v724 = vpop.f32.mrf.mxu0
    %725 = vdwg.mxu0
    %v726 = vpack.c.bf16 %v723, %v720
    %727 = vmatprep.subr.bf16.mxu0 0
    %728 = vmatpush1.bf16.msra.mxu0 0
    %729 = vmatprep.subr.bf16.mxu0 0
    %730 = vmatpush1.bf16.msra.mxu0 0
    %731 = vmatprep.subr.bf16.mxu0 0
    %732 = vmatpush1.bf16.msra.mxu0 0
    %733 = vmatprep.subr.bf16.mxu0 0
    %734 = vmatpush1.bf16.msra.mxu0 0
    %735 = vmatprep.subr.bf16.mxu0 0
    %736 = vmatpush1.bf16.msra.mxu0 0
    %737 = vmatprep.subr.bf16.mxu0 0
    %738 = vmatpush1.bf16.msra.mxu0 0
    %739 = vmatprep.subr.bf16.mxu0 0
    %740 = vmatpush1.bf16.msra.mxu0 0
    %741 = vmatprep.subr.bf16.mxu0 0
    %742 = vmatpush1.bf16.msra.mxu0 %v726
    %743 = vmatprep.subr.bf16.mxu0 0
    %744 = vmatpush2.bf16.msra.mxu0 0
    %745 = vmatprep.subr.bf16.mxu0 0
    %746 = vmatpush2.bf16.msra.mxu0 0
    %747 = vmatprep.subr.bf16.mxu0 0
    %748 = vmatpush2.bf16.msra.mxu0 0
    %749 = vmatprep.subr.bf16.mxu0 0
    %750 = vmatpush2.bf16.msra.mxu0 0
    %751 = vmatprep.subr.bf16.mxu0 0
    %752 = vmatpush2.bf16.msra.mxu0 0
    %753 = vmatprep.subr.bf16.mxu0 0
    %754 = vmatpush2.bf16.msra.mxu0 0
    %755 = vmatprep.subr.bf16.mxu0 0
    %756 = vmatpush2.bf16.msra.mxu0 0
    %757 = vmatprep.subr.bf16.mxu0 0
    %758 = vmatpush2.bf16.msra.mxu0 0
    %759 = vmatprep.mubr.bf16.mxu0 0
    %760 = vmatmul.mubr.bf16.gmra.mxu0 %v89
    %v761 = vpop.f32.mrf.mxu0
    %v762 = vadd.f32 0.0, %v761
    %v763 = vpop.f32.mrf.mxu0
    %v764 = vpop.f32.mrf.mxu0
    %v765 = vpop.f32.mrf.mxu0
    %766 = vdwg.mxu0
    %s767 = scalar_lea.vmem [#allocation5], 56
    %768 = vst [vmem:[%s767] sm:$0xff] %v762
    // Predicated region
    $region18: #{_resize_keypt_impl.1} parent=1 // pred_check
      _
    $region19: #{_resize_keypt_impl.1} parent=1 // pred_check_branch
      %770 = sbr.rel (0) target = $region21
    $region20: #{_resize_keypt_impl.1} parent=1 // pred_region
      %s772 = ssub.s32 1024, 1024
      %773 = vsyncadd [#allocation4], %s772
      %s774 = sshll.u32 [#allocation5], 4
      %s775 = int_to_ptr.vmem [resolvable:$true] %s774
      %780 = dma.vmem_to_hbm [thread:$0]  %s775, 1024, %s3, [#allocation4], 128, 128, 8
    $region21: #{_resize_keypt_impl.1} parent=1 // pred_fallthru
      _
    // Predicated region
    $region22: #{_resize_keypt_impl.1} parent=1 // pred_check
      _
    $region23: #{_resize_keypt_impl.1} parent=1 // pred_check_branch
      %782 = sbr.rel (0) target = $region25
    $region24: #{_resize_keypt_impl.1} parent=1 // pred_region
      %783 = dma.done [#allocation4], 1024
    $region25: #{_resize_keypt_impl.1} parent=1 // pred_fallthru
      _
    %784 = vsyncpa [#allocation3], 1
    %785 = vsyncpa [#allocation4], 1

</llo_original>
